<compile_context>
chip_gen: v7x
topology: tpu7x:2x2x1
jax: 0.10.0
libtpu: 0.0.40
codegen_flags: <defaults>
</compile_context>

<pallas_src>
import functools

import jax
import jax.numpy as jnp
from jax.experimental import pallas as pl
from jax.experimental.pallas import tpu as pltpu

HID1, HID2, HID3 = 100, 50, 30
LANES = 128
ROW_ALIGN = 16          # row-offset alignment in the weight slab (safe for f32 & bf16)
W2_OFF = 0              # rows [  0, 128): W2 zero-padded to [128, 128]
W3_OFF = LANES          # rows [128, 256): W3 zero-padded to [128, 128]
W1_OFF = 2 * LANES      # rows [256, ...): W1_s then W1_a, each ROW_ALIGN-padded
AUX_ROWS = 8            # f32 aux block: rows 0..4 hold b1, b2, b3, w4_row, b4


def _round_up(x, m):
    return (x + m - 1) // m * m


def _slab_layout(s_dim, a_dim):
    s_rows = _round_up(s_dim, ROW_ALIGN)
    a_rows = _round_up(a_dim, ROW_ALIGN)
    w1s_off = W1_OFF
    w1a_off = W1_OFF + s_rows
    slab_rows = w1a_off + a_rows
    return s_rows, a_rows, w1s_off, w1a_off, slab_rows


def _critic_kernel(s_ref, a_ref, w_ref, aux_ref, out_ref, *, s_rows, a_rows):
    cdt = w_ref.dtype
    w1s_off = W1_OFF
    w1a_off = W1_OFF + s_rows

    # Biases + fc4 row: one f32 vreg block, loaded once before the layer sequence.
    aux = aux_ref[...]                       # [8, 128] f32
    b1 = aux[0:1, :]
    b2 = aux[1:2, :]
    b3 = aux[2:3, :]
    w4_row = aux[3:4, :]                     # fc4 weights as a lane row (lanes >= 30 are 0)
    b4 = aux[4:5, 0:1]                       # fc4 bias, [1, 1]

    # Tile-aligned static slices of the VMEM-resident weight slab.
    w2 = w_ref[W2_OFF:W2_OFF + LANES, :]     # [128, 128]
    w3 = w_ref[W3_OFF:W3_OFF + LANES, :]     # [128, 128]
    w1s = w_ref[w1s_off:w1s_off + s_rows, :]
    w1a = w_ref[w1a_off:w1a_off + a_rows, :]

    # fc1 with the concat fused: [s|a] @ W1 == s @ W1_s + a @ W1_a
    h1 = (jnp.dot(s_ref[...], w1s, preferred_element_type=jnp.float32)
          + jnp.dot(a_ref[...], w1a, preferred_element_type=jnp.float32)
          + b1)
    h1 = jnp.maximum(h1, 0.0)                # [TM, 128]; lanes >= 100 stay exactly 0

    h2 = jnp.maximum(
        jnp.dot(h1.astype(cdt), w2, preferred_element_type=jnp.float32) + b2, 0.0)
    h3 = jnp.maximum(
        jnp.dot(h2.astype(cdt), w3, preferred_element_type=jnp.float32) + b3, 0.0)

    # fc4 (-> 1 column) on the VPU/XLU instead of a full [128,128] MXU pass.
    q = jnp.sum(h3 * w4_row, axis=-1, keepdims=True) + b4     # [TM, 1] f32
    out_ref[...] = q


def _choose_tiling(batch, tm_max, min_tiles):
    """Pick (tm, b_pad, n_tiles) minimizing pad waste; prefer >=2 even tiles (v7x)."""
    b8 = _round_up(batch, 8)
    n_tiles = max(pl.cdiv(b8, tm_max), min(min_tiles, b8 // 8), 1)
    if n_tiles > 1 and n_tiles % 2:
        n_tiles += 1                          # even tile count: both v7x TCs get equal work
    tm = _round_up(pl.cdiv(b8, n_tiles), 8)
    return tm, tm * n_tiles, n_tiles


def critic_forward(s, a, params, *, tm_max=2048, min_tiles=2):
    """Pallas implementation of CriticNet.forward(s, a). Returns [B, 1] float32."""
    w_slab, aux = params
    cdt = w_slab.dtype
    B, s_dim = s.shape
    a_dim = a.shape[1]
    s_rows, a_rows, _, _, slab_rows = _slab_layout(s_dim, a_dim)
    assert w_slab.shape == (slab_rows, LANES), "packed params do not match s/a dims"
    assert aux.shape == (AUX_ROWS, LANES)

    tm, b_pad, n_tiles = _choose_tiling(B, tm_max, min_tiles)
    # Batch-pad + lane-pad (zeros hit zero weight rows, so semantics unchanged).
    s = jnp.pad(s.astype(cdt), ((0, b_pad - B), (0, s_rows - s_dim)))
    a = jnp.pad(a.astype(cdt), ((0, b_pad - B), (0, a_rows - a_dim)))

    # VMEM estimate: lane-padded double-buffered s / a / out tiles + resident slabs.
    vmem_est = (3 * 2 * tm * LANES * 4
                + 2 * (slab_rows + AUX_ROWS) * LANES * 4 + (1 << 20))
    cp_kwargs = dict(dimension_semantics=("parallel",))
    if vmem_est > 16 * 1024 * 1024:          # only needed past v5e's 16 MiB default
        cp_kwargs["vmem_limit_bytes"] = min(2 * vmem_est, 48 * 1024 * 1024)

    kernel = functools.partial(_critic_kernel, s_rows=s_rows, a_rows=a_rows)
    out = pl.pallas_call(
        kernel,
        out_shape=jax.ShapeDtypeStruct((b_pad, 1), jnp.float32),
        grid=(n_tiles,),
        in_specs=[
            pl.BlockSpec((tm, s_rows), lambda i: (i, 0)),          # batch-tiled
            pl.BlockSpec((tm, a_rows), lambda i: (i, 0)),          # batch-tiled
            pl.BlockSpec((slab_rows, LANES), lambda i: (0, 0)),    # VMEM-resident weights
            pl.BlockSpec((AUX_ROWS, LANES), lambda i: (0, 0)),     # VMEM-resident biases
        ],
        out_specs=pl.BlockSpec((tm, 1), lambda i: (i, 0)),         # narrow (B, 1) output
        compiler_params=pltpu.CompilerParams(**cp_kwargs),
    )(s, a, w_slab, aux)
    # Padded batch rows hold bias-propagated junk; always slice them off.
    return out[:B]


def init_critic_params_raw(key, s_dim, a_dim):
    """Torch-equivalent init: W ~ N(0, 0.1), b = 0.1.  W stored as [in, out]."""
    dims = [(s_dim + a_dim, HID1), (HID1, HID2), (HID2, HID3), (HID3, 1)]
    raw = []
    for d_in, d_out in dims:
        key, sub = jax.random.split(key)
        w = jax.random.normal(sub, (d_in, d_out), dtype=jnp.float32) * 0.1
        b = jnp.full((d_out,), 0.1, dtype=jnp.float32)
        raw.append((w, b))
    return raw


def pack_critic_params(raw, s_dim, a_dim, compute_dtype=jnp.bfloat16):
    """Pack raw (W, b) pairs into (weight_slab[compute_dtype], aux[f32])."""
    (w1, b1), (w2, b2), (w3, b3), (w4, b4) = raw
    s_rows, a_rows, w1s_off, w1a_off, slab_rows = _slab_layout(s_dim, a_dim)

    slab = jnp.zeros((slab_rows, LANES), jnp.float32)
    slab = slab.at[W2_OFF:W2_OFF + HID1, :HID2].set(w2)
    slab = slab.at[W3_OFF:W3_OFF + HID2, :HID3].set(w3)
    slab = slab.at[w1s_off:w1s_off + s_dim, :HID1].set(w1[:s_dim])
    slab = slab.at[w1a_off:w1a_off + a_dim, :HID1].set(w1[s_dim:])
    slab = slab.astype(compute_dtype)

    aux = jnp.zeros((AUX_ROWS, LANES), jnp.float32)
    aux = aux.at[0, :HID1].set(b1)
    aux = aux.at[1, :HID2].set(b2)
    aux = aux.at[2, :HID3].set(b3)
    aux = aux.at[3, :HID3].set(w4[:, 0])     # fc4 weight as a lane row (VPU/XLU path)
    aux = aux.at[4, 0].set(b4[0])            # fc4 bias scalar
    return slab, aux


def critic_ref(s, a, raw):
    """Pure-JAX reference (mirrors the torch forward)."""
    x = jnp.concatenate([s, a], axis=1).astype(jnp.float32)
    for i, (w, b) in enumerate(raw):
        x = x @ w + b
        if i < len(raw) - 1:
            x = jnp.maximum(x, 0.0)
    return x


if __name__ == "__main__":
    key = jax.random.PRNGKey(0)
    s_dim, a_dim, batch = 12, 4, 8

    k_params, k_s, k_a = jax.random.split(key, 3)
    raw_params = init_critic_params_raw(k_params, s_dim, a_dim)
    s = jax.random.normal(k_s, (batch, s_dim), dtype=jnp.float32)
    a = jax.random.normal(k_a, (batch, a_dim), dtype=jnp.float32)
    ref = critic_ref(s, a, raw_params)

    # Default mode: bf16 MXU operands, f32 accumulation (v6e/v7x rate win).
    out_bf16 = critic_forward(s, a, pack_critic_params(raw_params, s_dim, a_dim))
    jax.block_until_ready(out_bf16)
    assert out_bf16.shape == (batch, 1)
    assert jnp.allclose(out_bf16, ref, atol=2e-2, rtol=5e-2), (
        f"bf16 max abs err {jnp.max(jnp.abs(out_bf16 - ref))}")

    # f32 exact-parity mode.
    out_f32 = critic_forward(
        s, a, pack_critic_params(raw_params, s_dim, a_dim, compute_dtype=jnp.float32))
    jax.block_until_ready(out_f32)
    assert out_f32.shape == (batch, 1)
    assert jnp.allclose(out_f32, ref, atol=1e-4, rtol=1e-4), (
        f"f32 max abs err {jnp.max(jnp.abs(out_f32 - ref))}")

    print("KERNEL_OK")
</pallas_src>

<mosaic_0001>
module attributes {stable_mosaic.version = 11 : i64} {
  func.func @_critic_kernel(%arg0: i32, %arg1: memref<8x16xbf16, #tpu.memory_space<vmem>>, %arg2: memref<8x16xbf16, #tpu.memory_space<vmem>>, %arg3: memref<288x128xbf16, #tpu.memory_space<vmem>>, %arg4: memref<8x128xf32, #tpu.memory_space<vmem>>, %arg5: memref<8x1xf32, #tpu.memory_space<vmem>>) attributes {dimension_semantics = [#tpu.dimension_semantics<parallel>], iteration_bounds = array<i64: 1>, scalar_prefetch = 0 : i64, scratch_operands = 0 : i64, tpu.core_type = #tpu.core_type<tc>, window_params = [{transform_indices = @transform_0, window_bounds = array<i64: 8, 16>}, {transform_indices = @transform_1, window_bounds = array<i64: 8, 16>}, {pipeline_mode = #tpu.pipeline_mode<synchronous>, transform_indices = @transform_2, window_bounds = array<i64: 288, 128>}, {pipeline_mode = #tpu.pipeline_mode<synchronous>, transform_indices = @transform_3, window_bounds = array<i64: 8, 128>}, {transform_indices = @transform_4, window_bounds = array<i64: 8, 1>}]} {
    %c0 = arith.constant 0 : index
    %c0_0 = arith.constant 0 : index
    %0 = vector.load %arg4[%c0, %c0_0] : memref<8x128xf32, #tpu.memory_space<vmem>>, vector<8x128xf32>
    %1 = vector.extract_strided_slice %0 {offsets = [0, 0], sizes = [1, 128], strides = [1, 1]} : vector<8x128xf32> to vector<1x128xf32>
    %2 = vector.extract_strided_slice %0 {offsets = [1, 0], sizes = [1, 128], strides = [1, 1]} : vector<8x128xf32> to vector<1x128xf32>
    %3 = vector.extract_strided_slice %0 {offsets = [2, 0], sizes = [1, 128], strides = [1, 1]} : vector<8x128xf32> to vector<1x128xf32>
    %4 = vector.extract_strided_slice %0 {offsets = [3, 0], sizes = [1, 128], strides = [1, 1]} : vector<8x128xf32> to vector<1x128xf32>
    %5 = vector.extract_strided_slice %0 {offsets = [4, 0], sizes = [1, 1], strides = [1, 1]} : vector<8x128xf32> to vector<1x1xf32>
    %c0_1 = arith.constant 0 : index
    %c0_2 = arith.constant 0 : index
    %6 = vector.load %arg3[%c0_1, %c0_2] : memref<288x128xbf16, #tpu.memory_space<vmem>>, vector<128x128xbf16>
    %c128 = arith.constant 128 : index
    %c0_3 = arith.constant 0 : index
    %7 = vector.load %arg3[%c128, %c0_3] : memref<288x128xbf16, #tpu.memory_space<vmem>>, vector<128x128xbf16>
    %c256 = arith.constant 256 : index
    %c0_4 = arith.constant 0 : index
    %8 = vector.load %arg3[%c256, %c0_4] : memref<288x128xbf16, #tpu.memory_space<vmem>>, vector<16x128xbf16>
    %c272 = arith.constant 272 : index
    %c0_5 = arith.constant 0 : index
    %9 = vector.load %arg3[%c272, %c0_5] : memref<288x128xbf16, #tpu.memory_space<vmem>>, vector<16x128xbf16>
    %c0_6 = arith.constant 0 : index
    %c0_7 = arith.constant 0 : index
    %10 = vector.load %arg1[%c0_6, %c0_7] : memref<8x16xbf16, #tpu.memory_space<vmem>>, vector<8x16xbf16>
    %cst = arith.constant dense<0.000000e+00> : vector<8x128xf32>
    %11 = tpu.matmul %10, %8, %cst {dimension_numbers = #tpu.dot_dimension_numbers<[1], [0], [0], [1], [0, 0, 1, 1], [], []>} : vector<8x16xbf16>, vector<16x128xbf16>, vector<8x128xf32> -> vector<8x128xf32>
    %c0_8 = arith.constant 0 : index
    %c0_9 = arith.constant 0 : index
    %12 = vector.load %arg2[%c0_8, %c0_9] : memref<8x16xbf16, #tpu.memory_space<vmem>>, vector<8x16xbf16>
    %cst_10 = arith.constant dense<0.000000e+00> : vector<8x128xf32>
    %13 = tpu.matmul %12, %9, %cst_10 {dimension_numbers = #tpu.dot_dimension_numbers<[1], [0], [0], [1], [0, 0, 1, 1], [], []>} : vector<8x16xbf16>, vector<16x128xbf16>, vector<8x128xf32> -> vector<8x128xf32>
    %14 = arith.addf %11, %13 : vector<8x128xf32>
    %15 = vector.broadcast %1 : vector<1x128xf32> to vector<8x128xf32>
    %16 = arith.addf %14, %15 : vector<8x128xf32>
    %cst_11 = arith.constant 0.000000e+00 : f32
    %17 = vector.broadcast %cst_11 : f32 to vector<8x128xf32>
    %18 = arith.maximumf %16, %17 : vector<8x128xf32>
    %19 = arith.truncf %18 : vector<8x128xf32> to vector<8x128xbf16>
    %cst_12 = arith.constant dense<0.000000e+00> : vector<8x128xf32>
    %20 = tpu.matmul %19, %6, %cst_12 {dimension_numbers = #tpu.dot_dimension_numbers<[1], [0], [0], [1], [0, 0, 1, 1], [], []>} : vector<8x128xbf16>, vector<128x128xbf16>, vector<8x128xf32> -> vector<8x128xf32>
    %21 = vector.broadcast %2 : vector<1x128xf32> to vector<8x128xf32>
    %22 = arith.addf %20, %21 : vector<8x128xf32>
    %cst_13 = arith.constant 0.000000e+00 : f32
    %23 = vector.broadcast %cst_13 : f32 to vector<8x128xf32>
    %24 = arith.maximumf %22, %23 : vector<8x128xf32>
    %25 = arith.truncf %24 : vector<8x128xf32> to vector<8x128xbf16>
    %cst_14 = arith.constant dense<0.000000e+00> : vector<8x128xf32>
    %26 = tpu.matmul %25, %7, %cst_14 {dimension_numbers = #tpu.dot_dimension_numbers<[1], [0], [0], [1], [0, 0, 1, 1], [], []>} : vector<8x128xbf16>, vector<128x128xbf16>, vector<8x128xf32> -> vector<8x128xf32>
    %27 = vector.broadcast %3 : vector<1x128xf32> to vector<8x128xf32>
    %28 = arith.addf %26, %27 : vector<8x128xf32>
    %cst_15 = arith.constant 0.000000e+00 : f32
    %29 = vector.broadcast %cst_15 : f32 to vector<8x128xf32>
    %30 = arith.maximumf %28, %29 : vector<8x128xf32>
    %31 = vector.broadcast %4 : vector<1x128xf32> to vector<8x128xf32>
    %32 = arith.mulf %30, %31 : vector<8x128xf32>
    %cst_16 = arith.constant dense<0.000000e+00> : vector<8xf32>
    %33 = vector.multi_reduction <add>, %32, %cst_16 [1] : vector<8x128xf32> to vector<8xf32>
    %34 = vector.shape_cast %33 : vector<8xf32> to vector<8x1xf32>
    %35 = vector.broadcast %5 : vector<1x1xf32> to vector<8x1xf32>
    %36 = arith.addf %34, %35 : vector<8x1xf32>
    %c0_17 = arith.constant 0 : index
    %c0_18 = arith.constant 0 : index
    %37 = vector.load %arg5[%c0_17, %c0_18] : memref<8x1xf32, #tpu.memory_space<vmem>>, vector<8x1xf32>
    tpu.vector_store %arg5[%c0_17, %c0_18], %36 {strides = array<i32>} : memref<8x1xf32, #tpu.memory_space<vmem>>, vector<8x1xf32>,
    return
  }
  func.func @transform_0(%arg0: i32) -> (i32, i32) {
    %c0_i32 = arith.constant 0 : i32
    %c0_i32_0 = arith.constant 0 : i32
    return %arg0, %c0_i32 : i32, i32
  }
  func.func @transform_1(%arg0: i32) -> (i32, i32) {
    %c0_i32 = arith.constant 0 : i32
    %c0_i32_0 = arith.constant 0 : i32
    return %arg0, %c0_i32 : i32, i32
  }
  func.func @transform_2(%arg0: i32) -> (i32, i32) {
    %c0_i32 = arith.constant 0 : i32
    %c0_i32_0 = arith.constant 0 : i32
    %c0_i32_1 = arith.constant 0 : i32
    return %c0_i32, %c0_i32_0 : i32, i32
  }
  func.func @transform_3(%arg0: i32) -> (i32, i32) {
    %c0_i32 = arith.constant 0 : i32
    %c0_i32_0 = arith.constant 0 : i32
    %c0_i32_1 = arith.constant 0 : i32
    return %c0_i32, %c0_i32_0 : i32, i32
  }
  func.func @transform_4(%arg0: i32) -> (i32, i32) {
    %c0_i32 = arith.constant 0 : i32
    %c0_i32_0 = arith.constant 0 : i32
    return %arg0, %c0_i32 : i32, i32
  }
}

</mosaic_0001>

<llo_original>
// kernel: tpu_custom_call.1
$region0: #{tpu_custom_call.1}
  #allocation0 [shape = 'u32[]', space=smem, size = 0x4, offset = 0x4, fixed_abs, tag = 'smem constant byte address 0x4 - core index']
  #allocation1 [shape = 'u32[144,128]{1,0:T(1,128)}', space=vmem, size = 0x12000, scoped, tag = 'internal scratch']
  %s0 = inlined_call_operand.hbm [shape: bf16[8,16], index: 0, kind: input, shape index: {}]
  %s1 = inlined_call_operand.hbm [shape: bf16[8,16], index: 1, kind: input, shape index: {}]
  %s2 = inlined_call_operand.hbm [shape: bf16[288,128], index: 2, kind: input, shape index: {}]
  %s3 = inlined_call_operand.vmem [shape: f32[8,128], index: 3, kind: input, shape index: {}]
  %s4 = inlined_call_operand.vmem [shape: f32[8,1], index: 4, kind: output, shape index: {}]
  %s5 = sld [smem:[#allocation0]]
  $region38: #{tpu_custom_call.1} parent=0
    _
  %s7 = ssub.s32 1, %s5
  %s8 = scalar_select 0, %s7, %s5
  $region1: #{tpu_custom_call.1} parent=0
    #allocation2 [shape = 'u8[2048]{0}', space=vmem, size = 0x800, scoped, tag = 'input window, operand 0, single buffered']
    #allocation3 [shape = 's32[1]{0}', space=sflag, size = 0x4, scoped, tag = 'scoped memory for tpu_custom_call.1']
    #allocation4 [shape = 'u8[2048]{0}', space=vmem, size = 0x800, scoped, tag = 'input window, operand 1, single buffered']
    #allocation5 [shape = 's32[1]{0}', space=sflag, size = 0x4, scoped, tag = 'scoped memory for tpu_custom_call.1']
    #allocation6 [shape = 'u8[73728]{0}', space=vmem, size = 0x12000, scoped, tag = 'input window, operand 2, single buffered']
    %9 = vsyncpa [#allocation3], 0
    %10 = vsyncpa [#allocation5], 0
    // Predicated region
    $region2: #{tpu_custom_call.1} parent=1 // pred_check
      _
    $region3: #{tpu_custom_call.1} parent=1 // pred_check_branch
      %12 = sbr.rel (0) target = $region5
    $region4: #{tpu_custom_call.1} parent=1 // pred_region
      %s14 = ssub.s32 64, 64
      %15 = vsyncadd [#allocation3], %s14
      %s17 = sshll.u32 [#allocation2], 4
      %s18 = int_to_ptr.vmem [resolvable:$true] %s17
      %20 = dma.hbm_to_vmem [thread:$0]  %s0, 64, %s18, [#allocation3]
    $region5: #{tpu_custom_call.1} parent=1 // pred_fallthru
      _
    // Predicated region
    $region6: #{tpu_custom_call.1} parent=1 // pred_check
      _
    $region7: #{tpu_custom_call.1} parent=1 // pred_check_branch
      %22 = sbr.rel (0) target = $region9
    $region8: #{tpu_custom_call.1} parent=1 // pred_region
      %s24 = ssub.s32 64, 64
      %25 = vsyncadd [#allocation5], %s24
      %s27 = sshll.u32 [#allocation4], 4
      %s28 = int_to_ptr.vmem [resolvable:$true] %s27
      %30 = dma.hbm_to_vmem [thread:$0]  %s1, 64, %s28, [#allocation5]
    $region9: #{tpu_custom_call.1} parent=1 // pred_fallthru
      _
    // Predicated region
    $region10: #{tpu_custom_call.1} parent=1 // pred_check
      _
    $region11: #{tpu_custom_call.1} parent=1 // pred_check_branch
      %32 = sbr.rel (0) target = $region13
    $region12: #{tpu_custom_call.1} parent=1 // pred_region
      %s34 = ssub.s32 2304, 2304
      %35 = vsyncadd [#allocation5], %s34
      %s36 = sshll.u32 [#allocation6], 4
      %s37 = int_to_ptr.vmem [resolvable:$true] %s36
      %42 = dma.hbm_to_vmem [thread:$0]  %s2, 2304, %s37, [#allocation5], 64, 64, 4
    $region13: #{tpu_custom_call.1} parent=1 // pred_fallthru
      _
    // Predicated region
    $region14: #{tpu_custom_call.1} parent=1 // pred_check
      _
    $region15: #{tpu_custom_call.1} parent=1 // pred_check_branch
      %44 = sbr.rel (0) target = $region17
    $region16: #{tpu_custom_call.1} parent=1 // pred_region
      _
    $region17: #{tpu_custom_call.1} parent=1 // pred_fallthru
      _
    // Predicated region
    $region18: #{tpu_custom_call.1} parent=1 // pred_check
      _
    $region19: #{tpu_custom_call.1} parent=1 // pred_check_branch
      %46 = sbr.rel (0) target = $region21
    $region20: #{tpu_custom_call.1} parent=1 // pred_region
      %47 = dma.done [#allocation3], 64
    $region21: #{tpu_custom_call.1} parent=1 // pred_fallthru
      _
    // Predicated region
    $region22: #{tpu_custom_call.1} parent=1 // pred_check
      _
    $region23: #{tpu_custom_call.1} parent=1 // pred_check_branch
      %49 = sbr.rel (0) target = $region25
    $region24: #{tpu_custom_call.1} parent=1 // pred_region
      %50 = dma.done [#allocation5], 64
    $region25: #{tpu_custom_call.1} parent=1 // pred_fallthru
      _
    // Predicated region
    $region26: #{tpu_custom_call.1} parent=1 // pred_check
      _
    $region27: #{tpu_custom_call.1} parent=1 // pred_check_branch
      %52 = sbr.rel (0) target = $region29
    $region28: #{tpu_custom_call.1} parent=1 // pred_region
      %53 = dma.done [#allocation5], 2304
    $region29: #{tpu_custom_call.1} parent=1 // pred_fallthru
      _
    %v55 = vld [vmem:[%s3] sm:$0xff]
    %v56 = vld [vmem:[#allocation6] sm:$0xf]
    %v57 = vld [vmem:[#allocation6 + $0x4] sm:$0xf]
    %v58 = vld [vmem:[#allocation6 + $0x8] sm:$0xf]
    %v59 = vld [vmem:[#allocation6 + $0xc] sm:$0xf]
    %v60 = vld [vmem:[#allocation6 + $0x10] sm:$0xf]
    %v61 = vld [vmem:[#allocation6 + $0x14] sm:$0xf]
    %v62 = vld [vmem:[#allocation6 + $0x18] sm:$0xf]
    %v63 = vld [vmem:[#allocation6 + $0x1c] sm:$0xf]
    %v64 = vld [vmem:[#allocation6 + $0x20] sm:$0xf]
    %v65 = vld [vmem:[#allocation6 + $0x24] sm:$0xf]
    %v66 = vld [vmem:[#allocation6 + $0x28] sm:$0xf]
    %v67 = vld [vmem:[#allocation6 + $0x2c] sm:$0xf]
    %v68 = vld [vmem:[#allocation6 + $0x30] sm:$0xf]
    %v69 = vld [vmem:[#allocation6 + $0x34] sm:$0xf]
    %v70 = vld [vmem:[#allocation6 + $0x38] sm:$0xf]
    %v71 = vld [vmem:[#allocation6 + $0x3c] sm:$0xf]
    %v72 = vld [vmem:[#allocation6 + $0x40] sm:$0xf]
    %v73 = vld [vmem:[#allocation6 + $0x44] sm:$0xf]
    %v74 = vld [vmem:[#allocation6 + $0x48] sm:$0xf]
    %v75 = vld [vmem:[#allocation6 + $0x4c] sm:$0xf]
    %v76 = vld [vmem:[#allocation6 + $0x50] sm:$0xf]
    %v77 = vld [vmem:[#allocation6 + $0x54] sm:$0xf]
    %v78 = vld [vmem:[#allocation6 + $0x58] sm:$0xf]
    %v79 = vld [vmem:[#allocation6 + $0x5c] sm:$0xf]
    %v80 = vld [vmem:[#allocation6 + $0x60] sm:$0xf]
    %v81 = vld [vmem:[#allocation6 + $0x64] sm:$0xf]
    %v82 = vld [vmem:[#allocation6 + $0x68] sm:$0xf]
    %v83 = vld [vmem:[#allocation6 + $0x6c] sm:$0xf]
    %v84 = vld [vmem:[#allocation6 + $0x70] sm:$0xf]
    %v85 = vld [vmem:[#allocation6 + $0x74] sm:$0xf]
    %v86 = vld [vmem:[#allocation6 + $0x78] sm:$0xf]
    %v87 = vld [vmem:[#allocation6 + $0x7c] sm:$0xf]
    %v88 = vld [vmem:[#allocation6 + $0x80] sm:$0xf]
    %v89 = vld [vmem:[#allocation6 + $0x84] sm:$0xf]
    %v90 = vld [vmem:[#allocation6 + $0x88] sm:$0xf]
    %v91 = vld [vmem:[#allocation6 + $0x8c] sm:$0xf]
    %v92 = vld [vmem:[#allocation2] sm:$0xf]
    %v93 = vld [vmem:[#allocation4] sm:$0xf]
    %v96 = vunpack.c.l.b16 %v90
    %v97 = vunpack.c.l.b16 %v91
    %v98 = vpack.c.b16 %v97, %v96
    %vm100 = vcmask 130048
    %v102 = vsel %vm100, %v93, 0
    %104 = vmatprep.subr.bf16.mxu0 0
    %105 = vmatpush1.bf16.msra.mxu0 %v98
    %106 = vmatprep.subr.bf16.mxu0 0
    %107 = vmatpush1.bf16.msra.mxu0 0
    %108 = vmatprep.subr.bf16.mxu0 0
    %109 = vmatpush1.bf16.msra.mxu0 0
    %110 = vmatprep.subr.bf16.mxu0 0
    %111 = vmatpush1.bf16.msra.mxu0 0
    %112 = vmatprep.subr.bf16.mxu0 0
    %113 = vmatpush1.bf16.msra.mxu0 0
    %114 = vmatprep.subr.bf16.mxu0 0
    %115 = vmatpush1.bf16.msra.mxu0 0
    %116 = vmatprep.subr.bf16.mxu0 0
    %117 = vmatpush1.bf16.msra.mxu0 0
    %118 = vmatprep.subr.bf16.mxu0 0
    %119 = vmatpush1.bf16.msra.mxu0 0
    %120 = vmatprep.subr.bf16.mxu0 0
    %121 = vmatpush1.bf16.msra.mxu0 0
    %122 = vmatprep.subr.bf16.mxu0 0
    %123 = vmatpush1.bf16.msra.mxu0 0
    %124 = vmatprep.subr.bf16.mxu0 0
    %125 = vmatpush1.bf16.msra.mxu0 0
    %126 = vmatprep.subr.bf16.mxu0 0
    %127 = vmatpush1.bf16.msra.mxu0 0
    %128 = vmatprep.subr.bf16.mxu0 0
    %129 = vmatpush1.bf16.msra.mxu0 0
    %130 = vmatprep.subr.bf16.mxu0 0
    %131 = vmatpush1.bf16.msra.mxu0 0
    %132 = vmatprep.subr.bf16.mxu0 0
    %133 = vmatpush1.bf16.msra.mxu0 0
    %134 = vmatprep.subr.bf16.mxu0 0
    %135 = vmatpush1.bf16.msra.mxu0 0
    %136 = vmatprep.mubr.bf16.mxu0 0
    %137 = vmatmul.mubr.bf16.gmra.mrb[0].mxu0 %v102
    %v138 = vpop.f32.mrb[0].mxu0
    %v139 = vadd.f32 0.0, %v138
    %v140 = vpop.f32.mrb[0].mxu0
    %v141 = vpop.f32.mrb[0].mxu0
    %v142 = vpop.f32.mrb[0].mxu0
    %143 = vdwg.mxu0
    %v146 = vunpack.c.l.b16 %v88
    %v147 = vunpack.c.l.b16 %v89
    %v148 = vpack.c.b16 %v147, %v146
    %v151 = vsel %vm100, %v92, 0
    %153 = vmatprep.subr.bf16.mxu0 0
    %154 = vmatpush1.bf16.msra.mxu0 %v148
    %155 = vmatprep.subr.bf16.mxu0 0
    %156 = vmatpush1.bf16.msra.mxu0 0
    %157 = vmatprep.subr.bf16.mxu0 0
    %158 = vmatpush1.bf16.msra.mxu0 0
    %159 = vmatprep.subr.bf16.mxu0 0
    %160 = vmatpush1.bf16.msra.mxu0 0
    %161 = vmatprep.subr.bf16.mxu0 0
    %162 = vmatpush1.bf16.msra.mxu0 0
    %163 = vmatprep.subr.bf16.mxu0 0
    %164 = vmatpush1.bf16.msra.mxu0 0
    %165 = vmatprep.subr.bf16.mxu0 0
    %166 = vmatpush1.bf16.msra.mxu0 0
    %167 = vmatprep.subr.bf16.mxu0 0
    %168 = vmatpush1.bf16.msra.mxu0 0
    %169 = vmatprep.subr.bf16.mxu0 0
    %170 = vmatpush1.bf16.msra.mxu0 0
    %171 = vmatprep.subr.bf16.mxu0 0
    %172 = vmatpush1.bf16.msra.mxu0 0
    %173 = vmatprep.subr.bf16.mxu0 0
    %174 = vmatpush1.bf16.msra.mxu0 0
    %175 = vmatprep.subr.bf16.mxu0 0
    %176 = vmatpush1.bf16.msra.mxu0 0
    %177 = vmatprep.subr.bf16.mxu0 0
    %178 = vmatpush1.bf16.msra.mxu0 0
    %179 = vmatprep.subr.bf16.mxu0 0
    %180 = vmatpush1.bf16.msra.mxu0 0
    %181 = vmatprep.subr.bf16.mxu0 0
    %182 = vmatpush1.bf16.msra.mxu0 0
    %183 = vmatprep.subr.bf16.mxu0 0
    %184 = vmatpush1.bf16.msra.mxu0 0
    %185 = vmatprep.mubr.bf16.mxu0 0
    %186 = vmatmul.mubr.bf16.gmra.mrb[0].mxu0 %v151
    %v187 = vpop.f32.mrb[0].mxu0
    %v188 = vadd.f32 %v139, %v187
    %v189 = vpop.f32.mrb[0].mxu0
    %v190 = vpop.f32.mrb[0].mxu0
    %v191 = vpop.f32.mrb[0].mxu0
    %192 = vdwg.mxu0
    %v193 = vlaneseq
    %v194 = vshrl.u32 %v193, 7
    %v195 = vsub.s32 0, %v194
    %v196 = vrot.slane %v55, %v195
    %v197 = vadd.f32 %v188, %v196
    %v198 = vmax.f32 %v197, 0.0
    %v199 = vpack.c.bf16 %v198, %v198
    %v200 = vlaneseq
    %v201 = vshrl.u32 %v200, 7
    %v202 = vsub.s32 1, %v201
    %v203 = vrot.slane %v55, %v202
    %v220 = vunpack.c.l.b16 %v56
    %v221 = vunpack.c.l.b16 %v57
    %v222 = vunpack.c.l.b16 %v58
    %v223 = vunpack.c.l.b16 %v59
    %v224 = vunpack.c.l.b16 %v60
    %v225 = vunpack.c.l.b16 %v61
    %v226 = vunpack.c.l.b16 %v62
    %v227 = vunpack.c.l.b16 %v63
    %v228 = vunpack.c.l.b16 %v64
    %v229 = vunpack.c.l.b16 %v65
    %v230 = vunpack.c.l.b16 %v66
    %v231 = vunpack.c.l.b16 %v67
    %v232 = vunpack.c.l.b16 %v68
    %v233 = vunpack.c.l.b16 %v69
    %v234 = vunpack.c.l.b16 %v70
    %v235 = vunpack.c.l.b16 %v71
    %v236 = vpack.c.b16 %v221, %v220
    %v237 = vpack.c.b16 %v223, %v222
    %v238 = vpack.c.b16 %v225, %v224
    %v239 = vpack.c.b16 %v227, %v226
    %v240 = vpack.c.b16 %v229, %v228
    %v241 = vpack.c.b16 %v231, %v230
    %v242 = vpack.c.b16 %v233, %v232
    %v243 = vpack.c.b16 %v235, %v234
    %252 = vmatprep.subr.bf16.mxu0 0
    %253 = vmatpush1.bf16.msra.mxu0 %v236
    %254 = vmatprep.subr.bf16.mxu0 0
    %255 = vmatpush1.bf16.msra.mxu0 %v237
    %256 = vmatprep.subr.bf16.mxu0 0
    %257 = vmatpush1.bf16.msra.mxu0 %v238
    %258 = vmatprep.subr.bf16.mxu0 0
    %259 = vmatpush1.bf16.msra.mxu0 %v239
    %260 = vmatprep.subr.bf16.mxu0 0
    %261 = vmatpush1.bf16.msra.mxu0 %v240
    %262 = vmatprep.subr.bf16.mxu0 0
    %263 = vmatpush1.bf16.msra.mxu0 %v241
    %264 = vmatprep.subr.bf16.mxu0 0
    %265 = vmatpush1.bf16.msra.mxu0 %v242
    %266 = vmatprep.subr.bf16.mxu0 0
    %267 = vmatpush1.bf16.msra.mxu0 %v243
    %268 = vmatprep.subr.bf16.mxu0 0
    %269 = vmatpush1.bf16.msra.mxu0 0
    %270 = vmatprep.subr.bf16.mxu0 0
    %271 = vmatpush1.bf16.msra.mxu0 0
    %272 = vmatprep.subr.bf16.mxu0 0
    %273 = vmatpush1.bf16.msra.mxu0 0
    %274 = vmatprep.subr.bf16.mxu0 0
    %275 = vmatpush1.bf16.msra.mxu0 0
    %276 = vmatprep.subr.bf16.mxu0 0
    %277 = vmatpush1.bf16.msra.mxu0 0
    %278 = vmatprep.subr.bf16.mxu0 0
    %279 = vmatpush1.bf16.msra.mxu0 0
    %280 = vmatprep.subr.bf16.mxu0 0
    %281 = vmatpush1.bf16.msra.mxu0 0
    %282 = vmatprep.subr.bf16.mxu0 0
    %283 = vmatpush1.bf16.msra.mxu0 0
    %284 = vmatprep.mubr.bf16.mxu0 0
    %285 = vmatmul.mubr.bf16.gmra.mrb[0].mxu0 %v199
    %v286 = vpop.f32.mrb[0].mxu0
    %v287 = vadd.f32 %v203, %v286
    %v288 = vpop.f32.mrb[0].mxu0
    %v289 = vpop.f32.mrb[0].mxu0
    %v290 = vpop.f32.mrb[0].mxu0
    %291 = vdwg.mxu0
    %v292 = vmax.f32 %v287, 0.0
    %v293 = vpack.c.bf16 %v292, %v292
    %v294 = vlaneseq
    %v295 = vshrl.u32 %v294, 7
    %v296 = vsub.s32 2, %v295
    %v297 = vrot.slane %v55, %v296
    %v314 = vunpack.c.l.b16 %v72
    %v315 = vunpack.c.l.b16 %v73
    %v316 = vunpack.c.l.b16 %v74
    %v317 = vunpack.c.l.b16 %v75
    %v318 = vunpack.c.l.b16 %v76
    %v319 = vunpack.c.l.b16 %v77
    %v320 = vunpack.c.l.b16 %v78
    %v321 = vunpack.c.l.b16 %v79
    %v322 = vunpack.c.l.b16 %v80
    %v323 = vunpack.c.l.b16 %v81
    %v324 = vunpack.c.l.b16 %v82
    %v325 = vunpack.c.l.b16 %v83
    %v326 = vunpack.c.l.b16 %v84
    %v327 = vunpack.c.l.b16 %v85
    %v328 = vunpack.c.l.b16 %v86
    %v329 = vunpack.c.l.b16 %v87
    %v330 = vpack.c.b16 %v315, %v314
    %v331 = vpack.c.b16 %v317, %v316
    %v332 = vpack.c.b16 %v319, %v318
    %v333 = vpack.c.b16 %v321, %v320
    %v334 = vpack.c.b16 %v323, %v322
    %v335 = vpack.c.b16 %v325, %v324
    %v336 = vpack.c.b16 %v327, %v326
    %v337 = vpack.c.b16 %v329, %v328
    %346 = vmatprep.subr.bf16.mxu0 0
    %347 = vmatpush1.bf16.msra.mxu0 %v330
    %348 = vmatprep.subr.bf16.mxu0 0
    %349 = vmatpush1.bf16.msra.mxu0 %v331
    %350 = vmatprep.subr.bf16.mxu0 0
    %351 = vmatpush1.bf16.msra.mxu0 %v332
    %352 = vmatprep.subr.bf16.mxu0 0
    %353 = vmatpush1.bf16.msra.mxu0 %v333
    %354 = vmatprep.subr.bf16.mxu0 0
    %355 = vmatpush1.bf16.msra.mxu0 %v334
    %356 = vmatprep.subr.bf16.mxu0 0
    %357 = vmatpush1.bf16.msra.mxu0 %v335
    %358 = vmatprep.subr.bf16.mxu0 0
    %359 = vmatpush1.bf16.msra.mxu0 %v336
    %360 = vmatprep.subr.bf16.mxu0 0
    %361 = vmatpush1.bf16.msra.mxu0 %v337
    %362 = vmatprep.subr.bf16.mxu0 0
    %363 = vmatpush1.bf16.msra.mxu0 0
    %364 = vmatprep.subr.bf16.mxu0 0
    %365 = vmatpush1.bf16.msra.mxu0 0
    %366 = vmatprep.subr.bf16.mxu0 0
    %367 = vmatpush1.bf16.msra.mxu0 0
    %368 = vmatprep.subr.bf16.mxu0 0
    %369 = vmatpush1.bf16.msra.mxu0 0
    %370 = vmatprep.subr.bf16.mxu0 0
    %371 = vmatpush1.bf16.msra.mxu0 0
    %372 = vmatprep.subr.bf16.mxu0 0
    %373 = vmatpush1.bf16.msra.mxu0 0
    %374 = vmatprep.subr.bf16.mxu0 0
    %375 = vmatpush1.bf16.msra.mxu0 0
    %376 = vmatprep.subr.bf16.mxu0 0
    %377 = vmatpush1.bf16.msra.mxu0 0
    %378 = vmatprep.mubr.bf16.mxu0 0
    %379 = vmatmul.mubr.bf16.gmra.mrb[0].mxu0 %v293
    %v380 = vpop.f32.mrb[0].mxu0
    %v381 = vadd.f32 %v297, %v380
    %v382 = vpop.f32.mrb[0].mxu0
    %v383 = vpop.f32.mrb[0].mxu0
    %v384 = vpop.f32.mrb[0].mxu0
    %385 = vdwg.mxu0
    %v386 = vmax.f32 %v381, 0.0
    %v387 = vlaneseq
    %v388 = vshrl.u32 %v387, 7
    %v389 = vsub.s32 3, %v388
    %v390 = vrot.slane %v55, %v389
    %v391 = vmul.f32 %v386, %v390
    %392 = vadd.xlane.f32.xlu0 %v391
    %v393 = vpop.xlane.xlu0 %392
    %v394 = vlaneseq
    %v395 = vshrl.u32 %v394, 7
    %v396 = vsub.s32 4, %v395
    %v397 = vrot.slane %v55, %v396
    %v398 = vadd.f32 %v393, %v397
    %vm399 = vcmask 7168
    %400 = vst.msk [vmem:[%s4] sm:$0xff] %vm399, %v398
    // Predicated region
    $region30: #{tpu_custom_call.1} parent=1 // pred_check
      _
    $region31: #{tpu_custom_call.1} parent=1 // pred_check_branch
      %402 = sbr.rel (0) target = $region33
    $region32: #{tpu_custom_call.1} parent=1 // pred_region
      _
    $region33: #{tpu_custom_call.1} parent=1 // pred_fallthru
      _
    // Predicated region
    $region34: #{tpu_custom_call.1} parent=1 // pred_check
      _
    $region35: #{tpu_custom_call.1} parent=1 // pred_check_branch
      %404 = sbr.rel (0) target = $region37
    $region36: #{tpu_custom_call.1} parent=1 // pred_region
      _
    $region37: #{tpu_custom_call.1} parent=1 // pred_fallthru
      _
    %405 = vsyncpa [#allocation3], 1
    %406 = vsyncpa [#allocation5], 1

</llo_original>
